<compile_context>
chip_gen: v7x
topology: tpu7x:2x2x1
jax: 0.10.0
libtpu: 0.0.40
codegen_flags: <defaults>
</compile_context>

<pallas_src>
import jax
import jax.numpy as jnp
from jax.experimental import pallas as pl
from jax.experimental.pallas import tpu as pltpu


def _conv_relu_kernel(w_ref, x_ref, b_ref, o_ref):
    # w_ref: (Cout, Kp)      bf16/f32   reshaped conv weights (K zero-padded)
    # x_ref: (Kp, M_blk)     bf16/f32   im2col patches, lane-dense (M on lanes)
    # b_ref: (Cout, 1)       f32
    # o_ref: (Cout, M_blk)   f32/bf16   lane-dense output
    acc = jnp.dot(w_ref[...], x_ref[...], preferred_element_type=jnp.float32)
    acc = acc + b_ref[...]                      # broadcast (Cout, 1) over lanes
    o_ref[...] = jnp.maximum(acc, 0.0).astype(o_ref.dtype)


def _round_up(x, m):
    return -(-x // m) * m


def basic_block_forward(x_nchw, weight, bias, *, stride, padding,
                        compute_dtype=jnp.bfloat16,
                        out_dtype=jnp.float32,
                        num_m_blocks=None,
                        vmem_limit_bytes=32 * 1024 * 1024):
    """Conv2d(stride, padding) + ReLU.

    x_nchw : (N, Cin, H, W)        float32
    weight : (Cout, Cin, KH, KW)   float32  (PyTorch layout)
    bias   : (Cout,)               float32
    returns (N, Cout, Hout, Wout)  float32
    """
    n, cin, h, w = x_nchw.shape
    cout, cin_w, kh_size, kw_size = weight.shape
    assert cin_w == cin
    hout = (h + 2 * padding - kh_size) // stride + 1
    wout = (w + 2 * padding - kw_size) // stride + 1
    k_dim = kh_size * kw_size * cin
    m_total = n * hout * wout

    in_bytes = jnp.dtype(compute_dtype).itemsize
    out_bytes = jnp.dtype(out_dtype).itemsize

    # K is the sublane (second-minor) axis of the patches operand: pad it to
    # the sublane packing of compute_dtype (16 for bf16, 8 for f32) so the
    # compiler never relayouts the big operand. Padded rows are zeros -> no
    # change to the contraction.
    k_sub = 8 * (4 // in_bytes)
    k_pad = _round_up(k_dim, k_sub)

    # ---- im2col, built directly lane-dense as (K, M) -----------------------
    # Only the leading axes are transposed (NCHW -> Cin,N,H,W); the contiguous
    # H,W minor dims are untouched, so this is cheap.
    # TODO(synk): for real AlexNet-sized layers, fuse the KH*KW shifted taps
    # into the pallas_call (shifted BlockSpecs / manual DMA) so HBM sees ~1x of
    # the activation instead of ~9x.
    x_cnhw = jnp.transpose(x_nchw, (1, 0, 2, 3))                    # (Cin,N,H,W)
    x_pad = jnp.pad(x_cnhw, ((0, 0), (0, 0),
                             (padding, padding), (padding, padding)))
    taps = []
    for kh in range(kh_size):
        for kw in range(kw_size):
            taps.append(x_pad[:, :, kh:kh + stride * hout:stride,
                              kw:kw + stride * wout:stride])        # (Cin,N,Ho,Wo)
    # K ordering is (kh, kw, cin); this MUST match the weight transpose below.
    patches = jnp.stack(taps, axis=0).reshape(k_dim, m_total)       # (K, M)

    # Weights: (Cout,Cin,KH,KW) -> (KH,KW,Cin,Cout) -> (K,Cout) -> (Cout,K),
    # i.e. the same (kh, kw, cin) flattening order of K as `patches`.
    w_t = jnp.transpose(weight, (2, 3, 1, 0)).reshape(k_dim, cout).T
    b_2d = bias.reshape(cout, 1).astype(jnp.float32)

    if k_pad != k_dim:
        patches = jnp.pad(patches, ((0, k_pad - k_dim), (0, 0)))
        w_t = jnp.pad(w_t, ((0, 0), (0, k_pad - k_dim)))

    # ---- M tiling: single block at toy size, VMEM-budgeted blocks otherwise.
    m_ceil = _round_up(m_total, 128)
    if num_m_blocks is None:
        # Budget: double-buffered patches + output blocks, plus (conservatively
        # double-buffered) weights/bias, with 25% headroom against the limit.
        budget = int(vmem_limit_bytes * 0.75) \
            - 2 * (cout * k_pad * in_bytes + cout * 4)
        per_lane = 2 * (k_pad * in_bytes + cout * out_bytes)
        m_block_cap = max(128, (budget // per_lane) // 128 * 128)
        num_m_blocks = pl.cdiv(m_ceil, m_block_cap)
    m_block = _round_up(pl.cdiv(m_ceil, num_m_blocks), 128)
    m_padded = m_block * num_m_blocks
    if m_padded != m_total:
        patches = jnp.pad(patches, ((0, 0), (0, m_padded - m_total)))

    patches = patches.astype(compute_dtype)
    w_t = w_t.astype(compute_dtype)

    out_flat = pl.pallas_call(
        _conv_relu_kernel,
        out_shape=jax.ShapeDtypeStruct((cout, m_padded), out_dtype),
        grid_spec=pltpu.PrefetchScalarGridSpec(
            num_scalar_prefetch=0,
            grid=(num_m_blocks,),
            in_specs=[
                # TODO(synk): for real Cout*K weights on v7x, mark these two
                # grid-invariant specs pipeline_mode=pl.Buffered(1) (or fold
                # bias into an extra K row) so they are not double-buffered.
                pl.BlockSpec((cout, k_pad), lambda i: (0, 0)),
                pl.BlockSpec((k_pad, m_block), lambda i: (0, i)),
                pl.BlockSpec((cout, 1), lambda i: (0, 0)),
            ],
            out_specs=pl.BlockSpec((cout, m_block), lambda i: (0, i)),
        ),
        compiler_params=pltpu.CompilerParams(
            dimension_semantics=("parallel",),
            vmem_limit_bytes=vmem_limit_bytes),
    )(w_t, patches, b_2d)

    # Zero-padded M columns hold ReLU(bias) garbage -> slice them off here.
    out = out_flat[:, :m_total].reshape(cout, n, hout, wout)
    # Leading-axis transpose back to NCHW (minor H,W dims untouched).
    # TODO(synk): skip this if the surrounding model consumes Cout-major/NHWC.
    return jnp.transpose(out, (1, 0, 2, 3)).astype(x_nchw.dtype)


def _reference_forward(x_nchw, weight, bias, *, stride, padding,
                       operand_dtype=None):
    lhs, rhs = x_nchw, weight
    if operand_dtype is not None:
        lhs = lhs.astype(operand_dtype)
        rhs = rhs.astype(operand_dtype)
    out = jax.lax.conv_general_dilated(
        lhs, rhs,
        window_strides=(stride, stride),
        padding=((padding, padding), (padding, padding)),
        dimension_numbers=("NCHW", "OIHW", "NCHW"),
        preferred_element_type=jnp.float32)
    out = out + bias.reshape(1, -1, 1, 1)
    return jnp.maximum(out, 0.0)


if __name__ == "__main__":
    # BasicBlock(inc=4, outc=8, kernel_size=3, stride=1, padding=1)
    INC, OUTC, KSIZE, STRIDE, PADDING = 4, 8, 3, 1, 1
    N, H, W = 2, 16, 16

    key = jax.random.PRNGKey(0)
    kx, kw_, kb = jax.random.split(key, 3)

    x = jax.random.normal(kx, (N, INC, H, W), dtype=jnp.float32)
    # Deterministic init mimicking PyTorch Conv2d default (uniform ±1/sqrt(fan_in)).
    fan_in = INC * KSIZE * KSIZE
    bound = 1.0 / (fan_in ** 0.5)
    weight = jax.random.uniform(kw_, (OUTC, INC, KSIZE, KSIZE),
                                minval=-bound, maxval=bound, dtype=jnp.float32)
    bias = jax.random.uniform(kb, (OUTC,), minval=-bound, maxval=bound,
                              dtype=jnp.float32)

    out = basic_block_forward(x, weight, bias, stride=STRIDE, padding=PADDING)
    out = jax.block_until_ready(out)

    # Matched-precision reference (bf16 operands, f32 accumulation): tight check.
    ref_matched = _reference_forward(x, weight, bias, stride=STRIDE,
                                     padding=PADDING,
                                     operand_dtype=jnp.bfloat16)
    ref_matched = jax.block_until_ready(ref_matched)
    # Full-f32 reference (PyTorch semantics): relaxed tolerance for bf16 operands.
    ref_f32 = _reference_forward(x, weight, bias, stride=STRIDE, padding=PADDING)
    ref_f32 = jax.block_until_ready(ref_f32)

    assert out.shape == (N, OUTC, H, W), out.shape
    assert jnp.allclose(out, ref_matched, atol=1e-3, rtol=1e-3), \
        float(jnp.max(jnp.abs(out - ref_matched)))
    assert jnp.allclose(out, ref_f32, atol=5e-2, rtol=5e-2), \
        float(jnp.max(jnp.abs(out - ref_f32)))

    print("KERNEL_OK")
</pallas_src>

<mosaic_0001>
module attributes {stable_mosaic.version = 11 : i64} {
  func.func @_conv_relu_kernel(%arg0: i32, %arg1: memref<8x48xbf16, #tpu.memory_space<vmem>>, %arg2: memref<48x512xbf16, #tpu.memory_space<vmem>>, %arg3: memref<8x1xf32, #tpu.memory_space<vmem>>, %arg4: memref<8x512xf32, #tpu.memory_space<vmem>>) attributes {dimension_semantics = [#tpu.dimension_semantics<parallel>], iteration_bounds = array<i64: 1>, scalar_prefetch = 0 : i64, scratch_operands = 0 : i64, tpu.core_type = #tpu.core_type<tc>, window_params = [{pipeline_mode = #tpu.pipeline_mode<synchronous>, transform_indices = @transform_0, window_bounds = array<i64: 8, 48>}, {transform_indices = @transform_1, window_bounds = array<i64: 48, 512>}, {pipeline_mode = #tpu.pipeline_mode<synchronous>, transform_indices = @transform_2, window_bounds = array<i64: 8, 1>}, {transform_indices = @transform_3, window_bounds = array<i64: 8, 512>}]} {
    %c0 = arith.constant 0 : index
    %c0_0 = arith.constant 0 : index
    %0 = vector.load %arg1[%c0, %c0_0] : memref<8x48xbf16, #tpu.memory_space<vmem>>, vector<8x48xbf16>
    %c0_1 = arith.constant 0 : index
    %c0_2 = arith.constant 0 : index
    %1 = vector.load %arg2[%c0_1, %c0_2] : memref<48x512xbf16, #tpu.memory_space<vmem>>, vector<48x512xbf16>
    %cst = arith.constant dense<0.000000e+00> : vector<8x512xf32>
    %2 = tpu.matmul %0, %1, %cst {dimension_numbers = #tpu.dot_dimension_numbers<[1], [0], [0], [1], [0, 0, 1, 1], [], []>} : vector<8x48xbf16>, vector<48x512xbf16>, vector<8x512xf32> -> vector<8x512xf32>
    %c0_3 = arith.constant 0 : index
    %c0_4 = arith.constant 0 : index
    %3 = vector.load %arg3[%c0_3, %c0_4] : memref<8x1xf32, #tpu.memory_space<vmem>>, vector<8x1xf32>
    %4 = vector.broadcast %3 : vector<8x1xf32> to vector<8x512xf32>
    %5 = arith.addf %2, %4 : vector<8x512xf32>
    %cst_5 = arith.constant 0.000000e+00 : f32
    %6 = vector.broadcast %cst_5 : f32 to vector<8x512xf32>
    %7 = arith.maximumf %5, %6 : vector<8x512xf32>
    %c0_6 = arith.constant 0 : index
    %c0_7 = arith.constant 0 : index
    %8 = vector.load %arg4[%c0_6, %c0_7] : memref<8x512xf32, #tpu.memory_space<vmem>>, vector<8x512xf32>
    tpu.vector_store %arg4[%c0_6, %c0_7], %7 {strides = array<i32>} : memref<8x512xf32, #tpu.memory_space<vmem>>, vector<8x512xf32>,
    return
  }
  func.func @transform_0(%arg0: i32) -> (i32, i32) {
    %c0_i32 = arith.constant 0 : i32
    %c0_i32_0 = arith.constant 0 : i32
    %c0_i32_1 = arith.constant 0 : i32
    return %c0_i32, %c0_i32_0 : i32, i32
  }
  func.func @transform_1(%arg0: i32) -> (i32, i32) {
    %c0_i32 = arith.constant 0 : i32
    %c0_i32_0 = arith.constant 0 : i32
    return %c0_i32, %arg0 : i32, i32
  }
  func.func @transform_2(%arg0: i32) -> (i32, i32) {
    %c0_i32 = arith.constant 0 : i32
    %c0_i32_0 = arith.constant 0 : i32
    %c0_i32_1 = arith.constant 0 : i32
    return %c0_i32, %c0_i32_0 : i32, i32
  }
  func.func @transform_3(%arg0: i32) -> (i32, i32) {
    %c0_i32 = arith.constant 0 : i32
    %c0_i32_0 = arith.constant 0 : i32
    return %c0_i32, %arg0 : i32, i32
  }
}

</mosaic_0001>

<llo_original>
// kernel: tpu_custom_call.1
$region0: #{tpu_custom_call.1}
  #allocation0 [shape = 'u32[]', space=smem, size = 0x4, offset = 0x4, fixed_abs, tag = 'smem constant byte address 0x4 - core index']
  #allocation1 [shape = 'u32[144,128]{1,0:T(1,128)}', space=vmem, size = 0x12000, scoped, tag = 'internal scratch']
  %s0 = inlined_call_operand.vmem [shape: bf16[8,48], index: 0, kind: input, shape index: {}]
  %s1 = inlined_call_operand.hbm [shape: bf16[48,512], index: 1, kind: input, shape index: {}]
  %s2 = inlined_call_operand.vmem [shape: f32[8,1], index: 2, kind: input, shape index: {}]
  %s3 = inlined_call_operand.hbm [shape: f32[8,512], index: 3, kind: output, shape index: {}]
  %s4 = sld [smem:[#allocation0]]
  $region26: #{tpu_custom_call.1} parent=0
    _
  %s6 = ssub.s32 1, %s4
  %s7 = scalar_select 0, %s6, %s4
  $region1: #{tpu_custom_call.1} parent=0
    #allocation2 [shape = 'u8[49152]{0}', space=vmem, size = 0xc000, scoped, tag = 'input window, operand 1, single buffered']
    #allocation3 [shape = 's32[1]{0}', space=sflag, size = 0x4, scoped, tag = 'scoped memory for tpu_custom_call.1']
    #allocation4 [shape = 's32[1]{0}', space=sflag, size = 0x4, scoped, tag = 'scoped memory for tpu_custom_call.1']
    #allocation5 [shape = 'u8[16384]{0}', space=vmem, size = 0x4000, scoped, tag = 'output window, operand 0, single buffered']
    %8 = vsyncpa [#allocation3], 0
    %9 = vsyncpa [#allocation4], 0
    // Predicated region
    $region2: #{tpu_custom_call.1} parent=1 // pred_check
      _
    $region3: #{tpu_custom_call.1} parent=1 // pred_check_branch
      %11 = sbr.rel (0) target = $region5
    $region4: #{tpu_custom_call.1} parent=1 // pred_region
      _
    $region5: #{tpu_custom_call.1} parent=1 // pred_fallthru
      _
    // Predicated region
    $region6: #{tpu_custom_call.1} parent=1 // pred_check
      _
    $region7: #{tpu_custom_call.1} parent=1 // pred_check_branch
      %13 = sbr.rel (0) target = $region9
    $region8: #{tpu_custom_call.1} parent=1 // pred_region
      %s15 = ssub.s32 1536, 1536
      %16 = vsyncadd [#allocation3], %s15
      %s17 = sshll.u32 [#allocation2], 4
      %s18 = int_to_ptr.vmem [resolvable:$true] %s17
      %23 = dma.hbm_to_vmem [thread:$0]  %s1, 1536, %s18, [#allocation3], 256, 256, 16
    $region9: #{tpu_custom_call.1} parent=1 // pred_fallthru
      _
    // Predicated region
    $region10: #{tpu_custom_call.1} parent=1 // pred_check
      _
    $region11: #{tpu_custom_call.1} parent=1 // pred_check_branch
      %25 = sbr.rel (0) target = $region13
    $region12: #{tpu_custom_call.1} parent=1 // pred_region
      _
    $region13: #{tpu_custom_call.1} parent=1 // pred_fallthru
      _
    // Predicated region
    $region14: #{tpu_custom_call.1} parent=1 // pred_check
      _
    $region15: #{tpu_custom_call.1} parent=1 // pred_check_branch
      %27 = sbr.rel (0) target = $region17
    $region16: #{tpu_custom_call.1} parent=1 // pred_region
      %28 = dma.done [#allocation3], 1536
    $region17: #{tpu_custom_call.1} parent=1 // pred_fallthru
      _
    %v30 = vld [vmem:[%s0] sm:$0xf]
    %v31 = vld [vmem:[#allocation2] sm:$0xff]
    %v32 = vld [vmem:[#allocation2 + $0x8] sm:$0xff]
    %v33 = vld [vmem:[#allocation2 + $0x10] sm:$0xff]
    %v34 = vld [vmem:[#allocation2 + $0x18] sm:$0xff]
    %v35 = vld [vmem:[#allocation2 + $0x20] sm:$0xff]
    %v36 = vld [vmem:[#allocation2 + $0x28] sm:$0xff]
    %v37 = vld [vmem:[#allocation2 + $0x30] sm:$0xff]
    %v38 = vld [vmem:[#allocation2 + $0x38] sm:$0xff]
    %v39 = vld [vmem:[#allocation2 + $0x40] sm:$0xff]
    %v40 = vld [vmem:[#allocation2 + $0x48] sm:$0xff]
    %v41 = vld [vmem:[#allocation2 + $0x50] sm:$0xff]
    %v42 = vld [vmem:[#allocation2 + $0x58] sm:$0xff]
    %v43 = vld [vmem:[%s2] sm:$0xff]
    %45 = vset.pattern.permute.xlu0 0
    %46 = vperm.xlu0 %45, %v43
    %v47 = vpop.permute.xlu0 %46
    %v61 = vunpack.c.l.b16 %v31
    %v62 = vunpack.c.h.b16 %v31
    %v63 = vunpack.c.l.b16 %v32
    %v64 = vunpack.c.h.b16 %v32
    %v65 = vunpack.c.l.b16 %v33
    %v66 = vunpack.c.h.b16 %v33
    %v67 = vunpack.c.l.b16 %v34
    %v68 = vunpack.c.h.b16 %v34
    %v69 = vunpack.c.l.b16 %v35
    %v70 = vunpack.c.h.b16 %v35
    %v71 = vunpack.c.l.b16 %v36
    %v72 = vunpack.c.h.b16 %v36
    %v73 = vunpack.c.l.b16 %v37
    %v74 = vunpack.c.h.b16 %v37
    %v75 = vunpack.c.l.b16 %v38
    %v76 = vunpack.c.h.b16 %v38
    %v77 = vunpack.c.l.b16 %v39
    %v78 = vunpack.c.h.b16 %v39
    %v79 = vunpack.c.l.b16 %v40
    %v80 = vunpack.c.h.b16 %v40
    %v81 = vunpack.c.l.b16 %v41
    %v82 = vunpack.c.h.b16 %v41
    %v83 = vunpack.c.l.b16 %v42
    %v84 = vunpack.c.h.b16 %v42
    %v85 = vpack.c.b16 %v65, %v61
    %v86 = vpack.c.b16 %v66, %v62
    %v87 = vpack.c.b16 %v67, %v63
    %v88 = vpack.c.b16 %v68, %v64
    %v89 = vpack.c.b16 %v73, %v69
    %v90 = vpack.c.b16 %v74, %v70
    %v91 = vpack.c.b16 %v75, %v71
    %v92 = vpack.c.b16 %v76, %v72
    %v93 = vpack.c.b16 %v81, %v77
    %v94 = vpack.c.b16 %v82, %v78
    %v95 = vpack.c.b16 %v83, %v79
    %v96 = vpack.c.b16 %v84, %v80
    %vm109 = vcmask 392192
    %v111 = vsel %vm109, %v30, 0
    %113 = vmatprep.subr.bf16.mxu0 %v86
    %114 = vmatpush1.bf16.msra.mxu0 %v85
    %115 = vmatprep.subr.bf16.mxu0 %v90
    %116 = vmatpush1.bf16.msra.mxu0 %v89
    %117 = vmatprep.subr.bf16.mxu0 %v94
    %118 = vmatpush1.bf16.msra.mxu0 %v93
    %119 = vmatprep.subr.bf16.mxu0 0
    %120 = vmatpush1.bf16.msra.mxu0 0
    %121 = vmatprep.subr.bf16.mxu0 0
    %122 = vmatpush1.bf16.msra.mxu0 0
    %123 = vmatprep.subr.bf16.mxu0 0
    %124 = vmatpush1.bf16.msra.mxu0 0
    %125 = vmatprep.subr.bf16.mxu0 0
    %126 = vmatpush1.bf16.msra.mxu0 0
    %127 = vmatprep.subr.bf16.mxu0 0
    %128 = vmatpush1.bf16.msra.mxu0 0
    %129 = vmatprep.subr.bf16.mxu0 0
    %130 = vmatpush1.bf16.msra.mxu0 0
    %131 = vmatprep.subr.bf16.mxu0 0
    %132 = vmatpush1.bf16.msra.mxu0 0
    %133 = vmatprep.subr.bf16.mxu0 0
    %134 = vmatpush1.bf16.msra.mxu0 0
    %135 = vmatprep.subr.bf16.mxu0 0
    %136 = vmatpush1.bf16.msra.mxu0 0
    %137 = vmatprep.subr.bf16.mxu0 0
    %138 = vmatpush1.bf16.msra.mxu0 0
    %139 = vmatprep.subr.bf16.mxu0 0
    %140 = vmatpush1.bf16.msra.mxu0 0
    %141 = vmatprep.subr.bf16.mxu0 0
    %142 = vmatpush1.bf16.msra.mxu0 0
    %143 = vmatprep.subr.bf16.mxu0 0
    %144 = vmatpush1.bf16.msra.mxu0 0
    %145 = vmatprep.mubr.bf16.mxu0 0
    %146 = vmatmul.mubr.bf16.gmra.mrb[0].mxu0 %v111
    %v147 = vpop.f32.mrb[0].mxu0
    %v148 = vadd.f32 %v47, %v147
    %v149 = vpop.f32.mrb[0].mxu0
    %v150 = vadd.f32 %v47, %v149
    %v151 = vpop.f32.mrb[0].mxu0
    %v152 = vpop.f32.mrb[0].mxu0
    %153 = vdwg.mxu0
    %154 = vmatprep.subr.bf16.mxu0 %v88
    %155 = vmatpush1.bf16.msra.mxu0 %v87
    %156 = vmatprep.subr.bf16.mxu0 %v92
    %157 = vmatpush1.bf16.msra.mxu0 %v91
    %158 = vmatprep.subr.bf16.mxu0 %v96
    %159 = vmatpush1.bf16.msra.mxu0 %v95
    %160 = vmatprep.subr.bf16.mxu0 0
    %161 = vmatpush1.bf16.msra.mxu0 0
    %162 = vmatprep.subr.bf16.mxu0 0
    %163 = vmatpush1.bf16.msra.mxu0 0
    %164 = vmatprep.subr.bf16.mxu0 0
    %165 = vmatpush1.bf16.msra.mxu0 0
    %166 = vmatprep.subr.bf16.mxu0 0
    %167 = vmatpush1.bf16.msra.mxu0 0
    %168 = vmatprep.subr.bf16.mxu0 0
    %169 = vmatpush1.bf16.msra.mxu0 0
    %170 = vmatprep.subr.bf16.mxu0 0
    %171 = vmatpush1.bf16.msra.mxu0 0
    %172 = vmatprep.subr.bf16.mxu0 0
    %173 = vmatpush1.bf16.msra.mxu0 0
    %174 = vmatprep.subr.bf16.mxu0 0
    %175 = vmatpush1.bf16.msra.mxu0 0
    %176 = vmatprep.subr.bf16.mxu0 0
    %177 = vmatpush1.bf16.msra.mxu0 0
    %178 = vmatprep.subr.bf16.mxu0 0
    %179 = vmatpush1.bf16.msra.mxu0 0
    %180 = vmatprep.subr.bf16.mxu0 0
    %181 = vmatpush1.bf16.msra.mxu0 0
    %182 = vmatprep.subr.bf16.mxu0 0
    %183 = vmatpush1.bf16.msra.mxu0 0
    %184 = vmatprep.subr.bf16.mxu0 0
    %185 = vmatpush1.bf16.msra.mxu0 0
    %186 = vmatprep.mubr.bf16.mxu0 0
    %187 = vmatmul.mubr.bf16.gmra.mrb[0].mxu0 %v111
    %v188 = vpop.f32.mrb[0].mxu0
    %v189 = vadd.f32 %v47, %v188
    %v190 = vpop.f32.mrb[0].mxu0
    %v191 = vadd.f32 %v47, %v190
    %v192 = vpop.f32.mrb[0].mxu0
    %v193 = vpop.f32.mrb[0].mxu0
    %194 = vdwg.mxu0
    %v195 = vmax.f32 %v148, 0.0
    %v196 = vmax.f32 %v150, 0.0
    %v197 = vmax.f32 %v189, 0.0
    %v198 = vmax.f32 %v191, 0.0
    %199 = vst [vmem:[#allocation5] sm:$0xff] %v195
    %200 = vst [vmem:[#allocation5 + $0x8] sm:$0xff] %v196
    %201 = vst [vmem:[#allocation5 + $0x10] sm:$0xff] %v197
    %202 = vst [vmem:[#allocation5 + $0x18] sm:$0xff] %v198
    // Predicated region
    $region18: #{tpu_custom_call.1} parent=1 // pred_check
      _
    $region19: #{tpu_custom_call.1} parent=1 // pred_check_branch
      %204 = sbr.rel (0) target = $region21
    $region20: #{tpu_custom_call.1} parent=1 // pred_region
      %s206 = ssub.s32 512, 512
      %207 = vsyncadd [#allocation4], %s206
      %s209 = sshll.u32 [#allocation5], 4
      %s210 = int_to_ptr.vmem [resolvable:$true] %s209
      %212 = dma.vmem_to_hbm [thread:$0]  %s210, 512, %s3, [#allocation4]
    $region21: #{tpu_custom_call.1} parent=1 // pred_fallthru
      _
    // Predicated region
    $region22: #{tpu_custom_call.1} parent=1 // pred_check
      _
    $region23: #{tpu_custom_call.1} parent=1 // pred_check_branch
      %214 = sbr.rel (0) target = $region25
    $region24: #{tpu_custom_call.1} parent=1 // pred_region
      %215 = dma.done [#allocation4], 512
    $region25: #{tpu_custom_call.1} parent=1 // pred_fallthru
      _
    %216 = vsyncpa [#allocation3], 1
    %217 = vsyncpa [#allocation4], 1

</llo_original>
